<compile_context>
chip_gen: v7x
topology: tpu7x:2x2x1
jax: 0.10.0
libtpu: 0.0.40
codegen_flags: <defaults>
</compile_context>

<pallas_src>
import math
import functools

import jax
import jax.numpy as jnp
import numpy as np
from jax import lax
from jax.experimental import pallas as pl
from jax.experimental.pallas import tpu as pltpu


def _arcface_kernel(flag_ref, xn_ref, wn_ref, t_ref, out_ref,
                    *, s, m, eps, apply_margin, nc, use_bf16_matmul):
    # flag_ref: (nb*nc,) int32 in SMEM (scalar prefetch)
    # xn_ref:  (tile_b, E) f32 (pre-normalized x)
    # wn_ref:  (tile_c, E) f32 (pre-normalized W)
    # t_ref:   (tile_b, 1) int32
    # out_ref: (tile_b, tile_c) f32/bf16
    i = pl.program_id(0)
    j = pl.program_id(1)

    xn = xn_ref[...]
    wn = wn_ref[...]
    if use_bf16_matmul:
        xn = xn.astype(jnp.bfloat16)
        wn = wn.astype(jnp.bfloat16)

    # cos_theta = xn @ wn.T -> (tile_b, tile_c), f32 accumulation on the MXU.
    cos_theta = lax.dot_general(
        xn, wn, (((1,), (1,)), ((), ())), preferred_element_type=jnp.float32
    )

    if not apply_margin:
        out_ref[...] = cos_theta.astype(out_ref.dtype)
        return

    cc = jnp.clip(cos_theta, -1.0 + eps, 1.0 - eps)
    has_target = flag_ref[i * nc + j] != 0

    @pl.when(has_target)
    def _():
        tb, tc = cc.shape
        col0 = j * tc
        # Local iota compare: (tile_b,1) subtract instead of full-tile add.
        t_local = t_ref[...] - col0
        one_hot = t_local == lax.broadcasted_iota(jnp.int32, (tb, tc), 1)

        cos_m = math.cos(m)
        sin_m = math.sin(m)

        # mask = one_hot & (theta <= pi - m)  <=>  one_hot & (cc >= -cos(m))
        mask = jnp.logical_and(one_hot, cc >= -cos_m)

        # cos(theta + m) via angle addition; sin(theta) = sqrt(1 - cc^2)
        sin_theta = jnp.sqrt(jnp.maximum(1.0 - cc * cc, 0.0))
        margin_logit = cc * cos_m - sin_theta * sin_m

        out_ref[...] = (jnp.where(mask, margin_logit, cc) * s).astype(out_ref.dtype)

    @pl.when(jnp.logical_not(has_target))
    def _():
        # No target in this tile: logits = cos(acos(clamp(cos_theta))) * s
        out_ref[...] = (cc * s).astype(out_ref.dtype)


def _round_up(a, b):
    return (a + b - 1) // b * b


def _l2_normalize(v, eps=1e-12):
    # Matches torch.nn.functional.normalize: v / max(||v||, eps)
    return v / jnp.maximum(jnp.linalg.norm(v, axis=-1, keepdims=True), eps)


def arcface_forward(x, weight, target=None, *, s=64.0, m=0.5, eps=1e-6,
                    tile_b=512, tile_c=512, out_dtype=jnp.float32,
                    use_bf16_matmul=False, vmem_limit_bytes=None):
    B, E = x.shape
    C, E2 = weight.shape
    assert E == E2

    apply_margin = target is not None and target.size > 0

    # One-shot normalization in the wrapper (O((B+C)*E) — trivial vs B*C out).
    xn = _l2_normalize(x.astype(jnp.float32))
    wn = _l2_normalize(weight.astype(jnp.float32))

    # Tile sizes: collapse for small dims, keep (8,128) alignment on the
    # output block so stores stay lane-dense / unmasked.
    tile_b = min(tile_b, _round_up(B, 8))
    tile_c = min(tile_c, _round_up(C, 128))
    B_pad = _round_up(B, tile_b)
    C_pad = _round_up(C, tile_c)
    nb, nc = B_pad // tile_b, C_pad // tile_c

    xn_p = xn if B_pad == B else jnp.pad(xn, ((0, B_pad - B), (0, 0)))
    wn_p = wn if C_pad == C else jnp.pad(wn, ((0, C_pad - C), (0, 0)))

    if apply_margin:
        t = target.astype(jnp.int32)
    else:
        t = jnp.zeros((B,), jnp.int32)  # dummy, unused when apply_margin=False
    if B_pad != B:
        # Padded rows get target = -1 so they never match any class column.
        t_p = jnp.full((B_pad,), -1, jnp.int32).at[:B].set(t)
    else:
        t_p = t

    # Per-(batch-tile, class-tile) flag (flat 1-D for tiny SMEM footprint):
    # does any row's target land in this class tile?  Built with a scatter —
    # no O(B*nc) broadcast intermediate.
    if apply_margin:
        row_block = jnp.arange(B_pad, dtype=jnp.int32) // tile_b
        valid = (t_p >= 0).astype(jnp.int32)
        tcls = jnp.where(t_p >= 0, t_p // tile_c, 0)
        flags = (
            jnp.zeros((nb, nc), jnp.int32).at[row_block, tcls].max(valid)
        ).reshape(nb * nc)
    else:
        flags = jnp.zeros((nb * nc,), jnp.int32)

    t2 = t_p.reshape(B_pad, 1)

    out_bytes = jnp.dtype(out_dtype).itemsize
    if vmem_limit_bytes is None:
        # Double-buffered inputs + output, with headroom; cap below v7x's
        # 64 MiB physical per-TC VMEM for compile robustness.
        tile_bytes = 2 * (4 * (tile_b * E + tile_c * E + tile_b)
                          + out_bytes * tile_b * tile_c)
        vmem_limit_bytes = min(max(tile_bytes + (4 << 20), 16 << 20), 48 << 20)

    kernel = functools.partial(
        _arcface_kernel, s=s, m=m, eps=eps, apply_margin=apply_margin,
        nc=nc, use_bf16_matmul=use_bf16_matmul,
    )

    out = pl.pallas_call(
        kernel,
        out_shape=jax.ShapeDtypeStruct((B_pad, C_pad), out_dtype),
        grid_spec=pltpu.PrefetchScalarGridSpec(
            num_scalar_prefetch=1,
            grid=(nb, nc),
            in_specs=[
                pl.BlockSpec((tile_b, E), lambda i, j, f: (i, 0)),   # xn: batch tile
                pl.BlockSpec((tile_c, E), lambda i, j, f: (j, 0)),   # wn: class tile
                pl.BlockSpec((tile_b, 1), lambda i, j, f: (i, 0)),   # target ids
            ],
            out_specs=pl.BlockSpec((tile_b, tile_c), lambda i, j, f: (i, j)),
        ),
        compiler_params=pltpu.CompilerParams(
            dimension_semantics=("parallel", "parallel"),
            vmem_limit_bytes=vmem_limit_bytes,
        ),
    )(flags, xn_p, wn_p, t2)

    if B_pad != B or C_pad != C:
        out = out[:B, :C]
    return out


def _reference(x, weight, target, s=64.0, m=0.5, eps=1e-6):
    # Pure-JAX reference mirroring the PyTorch forward (acos/cos explicitly).
    xn = x / jnp.maximum(jnp.linalg.norm(x, axis=-1, keepdims=True), 1e-12)
    wn = weight / jnp.maximum(jnp.linalg.norm(weight, axis=-1, keepdims=True), 1e-12)
    cos_theta = xn @ wn.T
    if target is None:
        return cos_theta
    theta = jnp.arccos(jnp.clip(cos_theta, -1.0 + eps, 1.0 - eps))
    one_hot = jax.nn.one_hot(target, weight.shape[0], dtype=cos_theta.dtype)
    mask = jnp.where(theta > (math.pi - m), jnp.zeros_like(one_hot), one_hot)
    logits = jnp.cos(jnp.where(mask.astype(bool), theta + m, theta))
    return logits * s


if __name__ == "__main__":
    emb_size, num_classes, batch = 32, 256, 8

    key = jax.random.PRNGKey(0)
    kx, kw, kt = jax.random.split(key, 3)

    # xavier_uniform_ for weight of shape (out_features, in_features)
    bound = math.sqrt(6.0 / (num_classes + emb_size))
    weight = jax.random.uniform(
        kw, (num_classes, emb_size), jnp.float32, minval=-bound, maxval=bound
    )
    x = jax.random.normal(kx, (batch, emb_size), jnp.float32)
    target = jax.random.randint(kt, (batch,), 0, num_classes, dtype=jnp.int32)

    # Path with target (margin logits)
    logits = arcface_forward(x, weight, target)
    jax.block_until_ready(logits)

    # Path without target (plain cosine similarities)
    cos_theta = arcface_forward(x, weight, None)
    jax.block_until_ready(cos_theta)

    # Silent correctness check against the pure-JAX reference
    np.testing.assert_allclose(
        np.asarray(logits), np.asarray(_reference(x, weight, target)),
        rtol=1e-4, atol=1e-4,
    )
    np.testing.assert_allclose(
        np.asarray(cos_theta), np.asarray(_reference(x, weight, None)),
        rtol=1e-4, atol=1e-4,
    )

    print("KERNEL_OK")
</pallas_src>

<mosaic_0001>
module attributes {stable_mosaic.version = 11 : i64} {
  func.func @_arcface_kernel(%arg0: i32, %arg1: i32, %arg2: memref<1xi32, #tpu.memory_space<smem>>, %arg3: memref<8x32xf32, #tpu.memory_space<vmem>>, %arg4: memref<256x32xf32, #tpu.memory_space<vmem>>, %arg5: memref<8x1xi32, #tpu.memory_space<vmem>>, %arg6: memref<8x256xf32, #tpu.memory_space<vmem>>) attributes {dimension_semantics = [#tpu.dimension_semantics<parallel>, #tpu.dimension_semantics<parallel>], iteration_bounds = array<i64: 1, 1>, scalar_prefetch = 1 : i64, scratch_operands = 0 : i64, tpu.core_type = #tpu.core_type<tc>, window_params = [{transform_indices = @transform_0, window_bounds = array<i64: 8, 32>}, {transform_indices = @transform_1, window_bounds = array<i64: 256, 32>}, {transform_indices = @transform_2, window_bounds = array<i64: 8, 1>}, {transform_indices = @transform_3, window_bounds = array<i64: 8, 256>}]} {
    %c0 = arith.constant 0 : index
    %c0_0 = arith.constant 0 : index
    %0 = vector.load %arg3[%c0, %c0_0] : memref<8x32xf32, #tpu.memory_space<vmem>>, vector<8x32xf32>
    %c0_1 = arith.constant 0 : index
    %c0_2 = arith.constant 0 : index
    %1 = vector.load %arg4[%c0_1, %c0_2] : memref<256x32xf32, #tpu.memory_space<vmem>>, vector<256x32xf32>
    %cst = arith.constant dense<0.000000e+00> : vector<8x256xf32>
    %2 = tpu.matmul %0, %1, %cst {dimension_numbers = #tpu.dot_dimension_numbers<[1], [1], [0], [0], [0, 0, 1, 0], [], []>} : vector<8x32xf32>, vector<256x32xf32>, vector<8x256xf32> -> vector<8x256xf32>
    %cst_3 = arith.constant -0.999998986 : f32
    %cst_4 = arith.constant 0.999998986 : f32
    %3 = vector.broadcast %cst_3 : f32 to vector<8x256xf32>
    %4 = arith.maximumf %3, %2 : vector<8x256xf32>
    %5 = vector.broadcast %cst_4 : f32 to vector<8x256xf32>
    %6 = arith.minimumf %5, %4 : vector<8x256xf32>
    %c1_i32 = arith.constant 1 : i32
    %7 = arith.muli %arg0, %c1_i32 : i32
    %8 = arith.addi %7, %arg1 : i32
    %9 = arith.index_cast %8 : i32 to index
    %10 = memref.load %arg2[%9] : memref<1xi32, #tpu.memory_space<smem>>
    %c0_i32 = arith.constant 0 : i32
    %11 = arith.cmpi ne, %10, %c0_i32 : i32
    %12 = arith.extui %11 : i1 to i32
    %c0_i32_5 = arith.constant 0 : i32
    %13 = arith.cmpi ne, %12, %c0_i32_5 : i32
    scf.if %13 {
      %c256_i32 = arith.constant 256 : i32
      %17 = arith.muli %arg1, %c256_i32 : i32
      %c0_7 = arith.constant 0 : index
      %c0_8 = arith.constant 0 : index
      %18 = vector.load %arg5[%c0_7, %c0_8] : memref<8x1xi32, #tpu.memory_space<vmem>>, vector<8x1xi32>
      %19 = vector.broadcast %17 : i32 to vector<8x1xi32>
      %20 = arith.subi %18, %19 : vector<8x1xi32>
      %21 = tpu.iota {dimensions = array<i32: 1>} : vector<8x256xi32>
      %22 = vector.broadcast %20 : vector<8x1xi32> to vector<8x256xi32>
      %23 = arith.cmpi eq, %22, %21 : vector<8x256xi32>
      %cst_9 = arith.constant -0.87758255 : f32
      %24 = vector.broadcast %cst_9 : f32 to vector<8x256xf32>
      %25 = arith.cmpf oge, %6, %24 : vector<8x256xf32>
      %26 = arith.andi %23, %25 : vector<8x256xi1>
      %27 = arith.mulf %6, %6 : vector<8x256xf32>
      %cst_10 = arith.constant 1.000000e+00 : f32
      %28 = vector.broadcast %cst_10 : f32 to vector<8x256xf32>
      %29 = arith.subf %28, %27 : vector<8x256xf32>
      %cst_11 = arith.constant 0.000000e+00 : f32
      %30 = vector.broadcast %cst_11 : f32 to vector<8x256xf32>
      %31 = arith.maximumf %29, %30 : vector<8x256xf32>
      %32 = math.sqrt %31 : vector<8x256xf32>
      %cst_12 = arith.constant 0.87758255 : f32
      %33 = vector.broadcast %cst_12 : f32 to vector<8x256xf32>
      %34 = arith.mulf %6, %33 : vector<8x256xf32>
      %cst_13 = arith.constant 0.47942555 : f32
      %35 = vector.broadcast %cst_13 : f32 to vector<8x256xf32>
      %36 = arith.mulf %32, %35 : vector<8x256xf32>
      %37 = arith.subf %34, %36 : vector<8x256xf32>
      %38 = arith.select %26, %37, %6 : vector<8x256xi1>, vector<8x256xf32>
      %cst_14 = arith.constant 6.400000e+01 : f32
      %39 = vector.broadcast %cst_14 : f32 to vector<8x256xf32>
      %40 = arith.mulf %38, %39 : vector<8x256xf32>
      %c0_15 = arith.constant 0 : index
      %c0_16 = arith.constant 0 : index
      %41 = vector.load %arg6[%c0_15, %c0_16] : memref<8x256xf32, #tpu.memory_space<vmem>>, vector<8x256xf32>
      tpu.vector_store %arg6[%c0_15, %c0_16], %40 {strides = array<i32>} : memref<8x256xf32, #tpu.memory_space<vmem>>, vector<8x256xf32>,
    } else {
    }
    %true = arith.constant true
    %14 = arith.xori %11, %true : i1
    %15 = arith.extui %14 : i1 to i32
    %c0_i32_6 = arith.constant 0 : i32
    %16 = arith.cmpi ne, %15, %c0_i32_6 : i32
    scf.if %16 {
      %cst_7 = arith.constant 6.400000e+01 : f32
      %17 = vector.broadcast %cst_7 : f32 to vector<8x256xf32>
      %18 = arith.mulf %6, %17 : vector<8x256xf32>
      %c0_8 = arith.constant 0 : index
      %c0_9 = arith.constant 0 : index
      %19 = vector.load %arg6[%c0_8, %c0_9] : memref<8x256xf32, #tpu.memory_space<vmem>>, vector<8x256xf32>
      tpu.vector_store %arg6[%c0_8, %c0_9], %18 {strides = array<i32>} : memref<8x256xf32, #tpu.memory_space<vmem>>, vector<8x256xf32>,
    } else {
    }
    return
  }
  func.func @transform_0(%arg0: i32, %arg1: i32, %arg2: memref<1xi32, #tpu.memory_space<smem>>) -> (i32, i32) {
    %c0_i32 = arith.constant 0 : i32
    %c0_i32_0 = arith.constant 0 : i32
    return %arg0, %c0_i32 : i32, i32
  }
  func.func @transform_1(%arg0: i32, %arg1: i32, %arg2: memref<1xi32, #tpu.memory_space<smem>>) -> (i32, i32) {
    %c0_i32 = arith.constant 0 : i32
    %c0_i32_0 = arith.constant 0 : i32
    return %arg1, %c0_i32 : i32, i32
  }
  func.func @transform_2(%arg0: i32, %arg1: i32, %arg2: memref<1xi32, #tpu.memory_space<smem>>) -> (i32, i32) {
    %c0_i32 = arith.constant 0 : i32
    %c0_i32_0 = arith.constant 0 : i32
    return %arg0, %c0_i32 : i32, i32
  }
  func.func @transform_3(%arg0: i32, %arg1: i32, %arg2: memref<1xi32, #tpu.memory_space<smem>>) -> (i32, i32) {
    %c0_i32 = arith.constant 0 : i32
    return %arg0, %arg1 : i32, i32
  }
}

</mosaic_0001>

<llo_original>
// kernel: tpu_custom_call.1
$region0: #{tpu_custom_call.1}
  #allocation0 [shape = 'u32[]', space=smem, size = 0x4, offset = 0x4, fixed_abs, tag = 'smem constant byte address 0x4 - core index']
  #allocation1 [shape = 'u32[144,128]{1,0:T(1,128)}', space=vmem, size = 0x12000, scoped, tag = 'internal scratch']
  #allocation2 [shape = 's32[1]{0}', space=sflag, size = 0x4, scoped, tag = 'scoped memory for tpu_custom_call.1']
  #allocation3 [shape = 's32[1]{0:T(128)S(6)}', space=smem, size = 0x200, scoped, tag = 'prefetched SMEM operand 0']
  %s0 = inlined_call_operand.<no memory space> [shape: s32[1], index: 0, kind: input, shape index: {}]
  %s1 = inlined_call_operand.vmem [shape: f32[8,32], index: 1, kind: input, shape index: {}]
  %s2 = inlined_call_operand.vmem [shape: f32[256,32], index: 2, kind: input, shape index: {}]
  %s3 = inlined_call_operand.vmem [shape: s32[8,1], index: 3, kind: input, shape index: {}]
  %s4 = inlined_call_operand.hbm [shape: f32[8,256], index: 4, kind: output, shape index: {}]
  %s5 = sld [smem:[#allocation0]]
  $region30: #{tpu_custom_call.1} parent=0
    _
  %s7 = ssub.s32 1, %s5
  %s8 = scalar_select 0, %s7, %s5
  %9 = sst [smem:[#allocation3]] %s0
  $region1: #{tpu_custom_call.1} parent=0
    #allocation4 [shape = 'u8[8192]{0}', space=vmem, size = 0x2000, scoped, tag = 'output window, operand 0, single buffered']
    #allocation5 [shape = 's32[1]{0}', space=sflag, size = 0x4, scoped, tag = 'scoped memory for tpu_custom_call.1']
    %10 = vsyncpa [#allocation5], 0
    // Predicated region
    $region2: #{tpu_custom_call.1} parent=1 // pred_check
      _
    $region3: #{tpu_custom_call.1} parent=1 // pred_check_branch
      %12 = sbr.rel (0) target = $region5
    $region4: #{tpu_custom_call.1} parent=1 // pred_region
      _
    $region5: #{tpu_custom_call.1} parent=1 // pred_fallthru
      _
    // Predicated region
    $region6: #{tpu_custom_call.1} parent=1 // pred_check
      _
    $region7: #{tpu_custom_call.1} parent=1 // pred_check_branch
      %14 = sbr.rel (0) target = $region9
    $region8: #{tpu_custom_call.1} parent=1 // pred_region
      _
    $region9: #{tpu_custom_call.1} parent=1 // pred_fallthru
      _
    // Predicated region
    $region10: #{tpu_custom_call.1} parent=1 // pred_check
      _
    $region11: #{tpu_custom_call.1} parent=1 // pred_check_branch
      %16 = sbr.rel (0) target = $region13
    $region12: #{tpu_custom_call.1} parent=1 // pred_region
      _
    $region13: #{tpu_custom_call.1} parent=1 // pred_fallthru
      _
    %v17 = vld [vmem:[%s1] sm:$0xff]
    %v18 = vld [vmem:[%s2] sm:$0xff]
    %v19 = vld [vmem:[%s2 + $0x8] sm:$0xff]
    %v20 = vld [vmem:[%s2 + $0x10] sm:$0xff]
    %v21 = vld [vmem:[%s2 + $0x18] sm:$0xff]
    %v22 = vld [vmem:[%s2 + $0x20] sm:$0xff]
    %v23 = vld [vmem:[%s2 + $0x28] sm:$0xff]
    %v24 = vld [vmem:[%s2 + $0x30] sm:$0xff]
    %v25 = vld [vmem:[%s2 + $0x38] sm:$0xff]
    %v26 = vld [vmem:[%s2 + $0x40] sm:$0xff]
    %v27 = vld [vmem:[%s2 + $0x48] sm:$0xff]
    %v28 = vld [vmem:[%s2 + $0x50] sm:$0xff]
    %v29 = vld [vmem:[%s2 + $0x58] sm:$0xff]
    %v30 = vld [vmem:[%s2 + $0x60] sm:$0xff]
    %v31 = vld [vmem:[%s2 + $0x68] sm:$0xff]
    %v32 = vld [vmem:[%s2 + $0x70] sm:$0xff]
    %v33 = vld [vmem:[%s2 + $0x78] sm:$0xff]
    %v34 = vld [vmem:[%s2 + $0x80] sm:$0xff]
    %v35 = vld [vmem:[%s2 + $0x88] sm:$0xff]
    %v36 = vld [vmem:[%s2 + $0x90] sm:$0xff]
    %v37 = vld [vmem:[%s2 + $0x98] sm:$0xff]
    %v38 = vld [vmem:[%s2 + $0xa0] sm:$0xff]
    %v39 = vld [vmem:[%s2 + $0xa8] sm:$0xff]
    %v40 = vld [vmem:[%s2 + $0xb0] sm:$0xff]
    %v41 = vld [vmem:[%s2 + $0xb8] sm:$0xff]
    %v42 = vld [vmem:[%s2 + $0xc0] sm:$0xff]
    %v43 = vld [vmem:[%s2 + $0xc8] sm:$0xff]
    %v44 = vld [vmem:[%s2 + $0xd0] sm:$0xff]
    %v45 = vld [vmem:[%s2 + $0xd8] sm:$0xff]
    %v46 = vld [vmem:[%s2 + $0xe0] sm:$0xff]
    %v47 = vld [vmem:[%s2 + $0xe8] sm:$0xff]
    %v48 = vld [vmem:[%s2 + $0xf0] sm:$0xff]
    %v49 = vld [vmem:[%s2 + $0xf8] sm:$0xff]
    %vm50 = vcmask 261120
    %v52 = vsel %vm50, %v17, 0
    %v55 = vsel %vm50, %v18, 0
    %v58 = vsel %vm50, %v19, 0
    %v61 = vsel %vm50, %v20, 0
    %v64 = vsel %vm50, %v21, 0
    %v67 = vsel %vm50, %v22, 0
    %v70 = vsel %vm50, %v23, 0
    %v73 = vsel %vm50, %v24, 0
    %v76 = vsel %vm50, %v25, 0
    %v79 = vsel %vm50, %v26, 0
    %v82 = vsel %vm50, %v27, 0
    %v85 = vsel %vm50, %v28, 0
    %v88 = vsel %vm50, %v29, 0
    %v91 = vsel %vm50, %v30, 0
    %v94 = vsel %vm50, %v31, 0
    %v97 = vsel %vm50, %v32, 0
    %v100 = vsel %vm50, %v33, 0
    %v103 = vsel %vm50, %v34, 0
    %v106 = vsel %vm50, %v35, 0
    %v109 = vsel %vm50, %v36, 0
    %v112 = vsel %vm50, %v37, 0
    %v115 = vsel %vm50, %v38, 0
    %v118 = vsel %vm50, %v39, 0
    %v121 = vsel %vm50, %v40, 0
    %v124 = vsel %vm50, %v41, 0
    %v127 = vsel %vm50, %v42, 0
    %v130 = vsel %vm50, %v43, 0
    %v133 = vsel %vm50, %v44, 0
    %v136 = vsel %vm50, %v45, 0
    %v139 = vsel %vm50, %v46, 0
    %v142 = vsel %vm50, %v47, 0
    %v145 = vsel %vm50, %v48, 0
    %v148 = vsel %vm50, %v49, 0
    %150 = vmatprep.subr.mxu0 0.0
    %151 = vmatpush1.xpose.msra.mxu0 %v55
    %152 = vmatprep.subr.mxu0 0.0
    %153 = vmatpush1.xpose.msra.mxu0 %v58
    %154 = vmatprep.subr.mxu0 0.0
    %155 = vmatpush1.xpose.msra.mxu0 %v61
    %156 = vmatprep.subr.mxu0 0.0
    %157 = vmatpush1.xpose.msra.mxu0 %v64
    %158 = vmatprep.subr.mxu0 0.0
    %159 = vmatpush1.xpose.msra.mxu0 %v67
    %160 = vmatprep.subr.mxu0 0.0
    %161 = vmatpush1.xpose.msra.mxu0 %v70
    %162 = vmatprep.subr.mxu0 0.0
    %163 = vmatpush1.xpose.msra.mxu0 %v73
    %164 = vmatprep.subr.mxu0 0.0
    %165 = vmatpush1.xpose.msra.mxu0 %v76
    %166 = vmatprep.subr.mxu0 0.0
    %167 = vmatpush1.xpose.msra.mxu0 %v79
    %168 = vmatprep.subr.mxu0 0.0
    %169 = vmatpush1.xpose.msra.mxu0 %v82
    %170 = vmatprep.subr.mxu0 0.0
    %171 = vmatpush1.xpose.msra.mxu0 %v85
    %172 = vmatprep.subr.mxu0 0.0
    %173 = vmatpush1.xpose.msra.mxu0 %v88
    %174 = vmatprep.subr.mxu0 0.0
    %175 = vmatpush1.xpose.msra.mxu0 %v91
    %176 = vmatprep.subr.mxu0 0.0
    %177 = vmatpush1.xpose.msra.mxu0 %v94
    %178 = vmatprep.subr.mxu0 0.0
    %179 = vmatpush1.xpose.msra.mxu0 %v97
    %180 = vmatprep.subr.mxu0 0.0
    %181 = vmatpush1.xpose.msra.mxu0 %v100
    %182 = vmatprep.subr.mxu0 0.0
    %183 = vmatpush1.xpose.msra.mxu0 %v103
    %184 = vmatprep.subr.mxu0 0.0
    %185 = vmatpush1.xpose.msra.mxu0 %v106
    %186 = vmatprep.subr.mxu0 0.0
    %187 = vmatpush1.xpose.msra.mxu0 %v109
    %188 = vmatprep.subr.mxu0 0.0
    %189 = vmatpush1.xpose.msra.mxu0 %v112
    %190 = vmatprep.subr.mxu0 0.0
    %191 = vmatpush1.xpose.msra.mxu0 %v115
    %192 = vmatprep.subr.mxu0 0.0
    %193 = vmatpush1.xpose.msra.mxu0 %v118
    %194 = vmatprep.subr.mxu0 0.0
    %195 = vmatpush1.xpose.msra.mxu0 %v121
    %196 = vmatprep.subr.mxu0 0.0
    %197 = vmatpush1.xpose.msra.mxu0 %v124
    %198 = vmatprep.subr.mxu0 0.0
    %199 = vmatpush1.xpose.msra.mxu0 %v127
    %200 = vmatprep.subr.mxu0 0.0
    %201 = vmatpush1.xpose.msra.mxu0 %v130
    %202 = vmatprep.subr.mxu0 0.0
    %203 = vmatpush1.xpose.msra.mxu0 %v133
    %204 = vmatprep.subr.mxu0 0.0
    %205 = vmatpush1.xpose.msra.mxu0 %v136
    %206 = vmatprep.subr.mxu0 0.0
    %207 = vmatpush1.xpose.msra.mxu0 %v139
    %208 = vmatprep.subr.mxu0 0.0
    %209 = vmatpush1.xpose.msra.mxu0 %v142
    %210 = vmatprep.subr.mxu0 0.0
    %211 = vmatpush1.xpose.msra.mxu0 %v145
    %212 = vmatprep.subr.mxu0 0.0
    %213 = vmatpush1.xpose.msra.mxu0 %v148
    %214 = vmatprep.mubr.f32.mxu0 0.0
    %215 = vmatmul.mubr.f32.gmra.mrb[0].mxu0 %v52
    %v216 = vpop.f32.mrb[0].mxu0
    %v217 = vadd.f32 0.0, %v216
    %v218 = vpop.f32.mrb[0].mxu0
    %v219 = vadd.f32 0.0, %v218
    %220 = vdwg.mxu0
    %v221 = vmax.f32 %v217, -0.999999
    %v222 = vmax.f32 %v219, -0.999999
    %v223 = vmin.f32 %v221, 0.999999
    %v224 = vmin.f32 %v222, 0.999999
    %s225 = sadd.s32 0, 0
    %s226 = sld [smem:[#allocation3 + %s225]]
    %p227 = scmp.ne.s32.totalorder %s226, 0
    // Predicated region
    $region14: #{tpu_custom_call.1} parent=1 // pred_check
      %p228 = pneg %p227
    $region15: #{tpu_custom_call.1} parent=1 // pred_check_branch
      %230 = sbr.rel (%p228) target = $region17
    $region16: #{tpu_custom_call.1} parent=1 // pred_region
      %s231 = smul.u32 0, 256
      %v232 = vld [vmem:[%s3] sm:$0xff]
      %v233 = vstv %s231
      %v234 = vsub.s32 %v232, %v233
      %v235 = vlaneseq
      %v236 = vand.u32 %v235, 127
      %v237 = vadd.s32 %v236, 128
      %238 = vset.pattern.permute.xlu0 0
      %239 = vperm.xlu0 %238, %v234
      %v240 = vpop.permute.xlu0 %239
      %vm241 = vcmp.eq.s32.totalorder %v240, %v236
      %vm242 = vcmp.eq.s32.totalorder %v240, %v237
      %vm243 = vcmp.ge.f32.partialorder %v223, -0.87758255
      %vm244 = vcmp.ge.f32.partialorder %v224, -0.87758255
      %vm245 = vmand %vm241, %vm243
      %vm246 = vmand %vm242, %vm244
      %v247 = vmul.f32 %v223, %v223
      %v248 = vmul.f32 %v224, %v224
      %v249 = vsub.f32 1.0, %v247
      %v250 = vsub.f32 1.0, %v248
      %v251 = vmax.f32 %v249, 0.0
      %v252 = vmax.f32 %v250, 0.0
      %v253 = vrsqrt.pop %v251
      %v254 = vmul.f32 %v251, %v253
      %vm255 = vcmp.eq.f32.partialorder %v251, inf
      %v256 = vsel %vm255, %v251, %v254
      %vm257 = vcmp.eq.f32.partialorder %v251, 0.0
      %v258 = vand.u32 %v251, 2147483648
      %v259 = vsel %vm257, %v258, %v256
      %v260 = vrsqrt.pop %v252
      %v261 = vmul.f32 %v252, %v260
      %vm262 = vcmp.eq.f32.partialorder %v252, inf
      %v263 = vsel %vm262, %v252, %v261
      %vm264 = vcmp.eq.f32.partialorder %v252, 0.0
      %v265 = vand.u32 %v252, 2147483648
      %v266 = vsel %vm264, %v265, %v263
      %v267 = vmul.f32 %v223, 0.87758255
      %v268 = vmul.f32 %v224, 0.87758255
      %v269 = vmul.f32 %v259, 0.47942555
      %v270 = vmul.f32 %v266, 0.47942555
      %v271 = vsub.f32 %v267, %v269
      %v272 = vsub.f32 %v268, %v270
      %v273 = vsel %vm245, %v271, %v223
      %v274 = vsel %vm246, %v272, %v224
      %v275 = vmul.f32 %v273, 64.0
      %v276 = vmul.f32 %v274, 64.0
      %277 = vst [vmem:[#allocation4] sm:$0xff] %v275
      %278 = vst [vmem:[#allocation4 + $0x8] sm:$0xff] %v276
    $region17: #{tpu_custom_call.1} parent=1 // pred_fallthru
      _
    %p279 = scmp.eq.s32.totalorder %s226, 0
    // Predicated region
    $region18: #{tpu_custom_call.1} parent=1 // pred_check
      %p280 = pneg %p279
    $region19: #{tpu_custom_call.1} parent=1 // pred_check_branch
      %282 = sbr.rel (%p280) target = $region21
    $region20: #{tpu_custom_call.1} parent=1 // pred_region
      %v283 = vmul.f32 %v223, 64.0
      %v284 = vmul.f32 %v224, 64.0
      %285 = vst [vmem:[#allocation4] sm:$0xff] %v283
      %286 = vst [vmem:[#allocation4 + $0x8] sm:$0xff] %v284
    $region21: #{tpu_custom_call.1} parent=1 // pred_fallthru
      _
    // Predicated region
    $region22: #{tpu_custom_call.1} parent=1 // pred_check
      _
    $region23: #{tpu_custom_call.1} parent=1 // pred_check_branch
      %288 = sbr.rel (0) target = $region25
    $region24: #{tpu_custom_call.1} parent=1 // pred_region
      %s290 = ssub.s32 256, 256
      %291 = vsyncadd [#allocation5], %s290
      %s293 = sshll.u32 [#allocation4], 4
      %s294 = int_to_ptr.vmem [resolvable:$true] %s293
      %296 = dma.vmem_to_hbm [thread:$0]  %s294, 256, %s4, [#allocation5]
    $region25: #{tpu_custom_call.1} parent=1 // pred_fallthru
      _
    // Predicated region
    $region26: #{tpu_custom_call.1} parent=1 // pred_check
      _
    $region27: #{tpu_custom_call.1} parent=1 // pred_check_branch
      %298 = sbr.rel (0) target = $region29
    $region28: #{tpu_custom_call.1} parent=1 // pred_region
      %299 = dma.done [#allocation5], 256
    $region29: #{tpu_custom_call.1} parent=1 // pred_fallthru
      _
    %300 = vsyncpa [#allocation5], 1

</llo_original>
